<compile_context>
chip_gen: v5e
topology: v5e:2x2
jax: 0.10.0
libtpu: 0.0.40
codegen_flags: <defaults>
</compile_context>

<pallas_src>
import math

import jax
import jax.numpy as jnp
from jax.experimental import pallas as pl
from jax.experimental.pallas import tpu as pltpu

_FOLD = 32   # 4 outputs * 32 folded rows = 128 lanes -> fully dense output block
_OUT = 4     # task head width (last Linear out_features)


def _linear_kernel(x_ref, w_ref, b_ref, o_ref):
    # (tile, K) @ (K, N) + (1, N) -> (tile, N), f32 accumulation on the MXU.
    o_ref[...] = (
        jnp.dot(x_ref[...], w_ref[...], preferred_element_type=jnp.float32)
        + b_ref[...]
    ).astype(o_ref.dtype)


def _round_up(n, m):
    return ((n + m - 1) // m) * m


def fuse_params(params):
    """Collapse the 3 bias-affine layers into one (E,4) weight + (1,4) bias and
    pre-build the block-diagonal folded variants for the lane-dense path.

    NOTE: re-run after every parameter update (the fusion is an algebraic
    identity but changes f32 rounding order vs. the sequential forward)."""
    w1, b1, w2, b2, w3, b3 = params
    w = w1 @ w2 @ w3                        # (E, 4)
    b = (b1 @ w2 + b2) @ w3 + b3            # (1, 4)
    eye = jnp.eye(_FOLD, dtype=w.dtype)
    w_fold = jnp.einsum("ij,eo->iejo", eye, w).reshape(
        _FOLD * w.shape[0], _FOLD * w.shape[1])     # (E*32, 4*32) block-diagonal
    b_fold = jnp.tile(b, (1, _FOLD))                # (1, 4*32)
    return w, b, w_fold, b_fold


def _pick_tile(rows, k, n, itemsize, want_rows):
    """Row tile: multiple of 8 (or full extent), >= 2 grid steps when possible
    (v7x has 2 TensorCores), and double-buffered in+out blocks within a ~24 MiB
    VMEM budget (lane-padded accounting, safe on v5e/v6e/v7x defaults)."""
    if rows <= 8:
        return rows                              # full-extent block, 1 step
    lane_pad = lambda d: _round_up(d, 128)
    bytes_per_row = (lane_pad(k) + lane_pad(n)) * itemsize
    vmem_cap = max(8, ((24 * 1024 * 1024) // (2 * bytes_per_row)) // 8 * 8)
    two_step_cap = _round_up(pl.cdiv(rows, 2), 8)   # keep >= 2 parallel steps
    tile = min(want_rows, vmem_cap, two_step_cap)
    return max(8, (tile // 8) * 8)


def _streaming_linear(x2d, w2d, b2d, tile_rows):
    """y = x2d @ w2d + b2d streamed over row tiles.  The last grid block may be
    ragged (grid = cdiv): its out-of-range rows read unspecified data but their
    writes are clipped — safe because the op is strictly row-wise."""
    rows, k = x2d.shape
    n = w2d.shape[1]
    itemsize = jnp.dtype(x2d.dtype).itemsize
    cost = pl.CostEstimate(
        flops=2 * rows * k * n,
        transcendentals=0,
        bytes_accessed=rows * (k + n) * itemsize
        + (k * n + n) * jnp.dtype(w2d.dtype).itemsize,
    )
    return pl.pallas_call(
        _linear_kernel,
        out_shape=jax.ShapeDtypeStruct((rows, n), x2d.dtype),
        grid=(pl.cdiv(rows, tile_rows),),
        in_specs=[
            pl.BlockSpec((tile_rows, k), lambda i: (i, 0)),  # x: tiled over rows
            pl.BlockSpec((k, n), lambda i: (0, 0)),          # fused W, VMEM-resident
            pl.BlockSpec((1, n), lambda i: (0, 0)),          # fused bias
        ],
        out_specs=pl.BlockSpec((tile_rows, n), lambda i: (i, 0)),
        compiler_params=pltpu.CompilerParams(
            dimension_semantics=("parallel",)),              # megacore-shardable
        cost_estimate=cost,
    )(x2d, w2d, b2d)


def task_prediction_forward(x, fused_params, *, tile_b=8192):
    """Fused forward pass of TaskPredictionModel.  x: (B, E) -> (B, 4)."""
    w, b, w_fold, b_fold = fused_params
    B, E = x.shape
    itemsize = jnp.dtype(x.dtype).itemsize

    if B >= _FOLD and B % _FOLD == 0:
        # Lane-dense folded path: 32 consecutive rows -> one 2048-wide folded
        # row; output block is 128 lanes wide.  Reshape of a contiguous
        # row-major array is free (no HBM copy).
        rows = B // _FOLD
        xf = x.reshape(rows, _FOLD * E)
        kf, nf = _FOLD * E, _FOLD * _OUT
        tile = _pick_tile(rows, kf, nf, itemsize, max(1, tile_b // _FOLD))
        out = _streaming_linear(xf, w_fold, b_fold, tile)
        return out.reshape(B, _OUT)

    # Ragged fallback: no pad and no bulk-slice copy (either would re-stream
    # the whole of x through HBM); Pallas clips the partial last block.
    tile = _pick_tile(B, E, _OUT, itemsize, tile_b)
    return _streaming_linear(x, w, b, tile)


def init_params(key, embed_size):
    """Xavier-uniform weights (nn.init.xavier_uniform_), zero biases.
    Weights stored transposed to (in_features, out_features) so y = x @ W + b."""
    h = embed_size // 2
    dims = [(embed_size, h), (h, h), (h, _OUT)]
    params = []
    keys = jax.random.split(key, len(dims))
    for kk, (fan_in, fan_out) in zip(keys, dims):
        bound = math.sqrt(6.0 / (fan_in + fan_out))
        wgt = jax.random.uniform(kk, (fan_in, fan_out), jnp.float32,
                                 minval=-bound, maxval=bound)
        params += [wgt, jnp.zeros((1, fan_out), jnp.float32)]
    return tuple(params)


if __name__ == "__main__":
    EMBED = 64   # embed_size

    key = jax.random.PRNGKey(0)
    k_param, k_xa, k_xb = jax.random.split(key, 3)

    params = init_params(k_param, EMBED)
    fused = fuse_params(params)

    w1, b1, w2, b2, w3, b3 = params

    def reference(xx):
        # Original (unfused) 3-layer chain in plain JAX.
        return ((xx @ w1 + b1) @ w2 + b2) @ w3 + b3

    # Path 1: batch divisible by 32 -> lane-dense folded kernel, 2-step grid.
    xa = jax.random.normal(k_xa, (512, EMBED), jnp.float32)
    out_a = jax.block_until_ready(task_prediction_forward(xa, fused))
    assert out_a.shape == (512, 4)
    assert jnp.allclose(out_a, reference(xa), atol=1e-4, rtol=1e-4), \
        float(jnp.max(jnp.abs(out_a - reference(xa))))

    # Path 2: ragged batch -> pad-free partial-last-block fallback.
    xb = jax.random.normal(k_xb, (300, EMBED), jnp.float32)
    out_b = jax.block_until_ready(task_prediction_forward(xb, fused))
    assert out_b.shape == (300, 4)
    assert jnp.allclose(out_b, reference(xb), atol=1e-4, rtol=1e-4), \
        float(jnp.max(jnp.abs(out_b - reference(xb))))

    print("KERNEL_OK")
</pallas_src>

<mosaic_0001>
module attributes {stable_mosaic.version = 11 : i64} {
  func.func @_linear_kernel(%arg0: i32, %arg1: memref<8x2048xf32, #tpu.memory_space<vmem>>, %arg2: memref<2048x128xf32, #tpu.memory_space<vmem>>, %arg3: memref<1x128xf32, #tpu.memory_space<vmem>>, %arg4: memref<8x128xf32, #tpu.memory_space<vmem>>) attributes {dimension_semantics = [#tpu.dimension_semantics<parallel>], iteration_bounds = array<i64: 2>, scalar_prefetch = 0 : i64, scratch_operands = 0 : i64, tpu.core_type = #tpu.core_type<tc>, window_params = [{transform_indices = @transform_0, window_bounds = array<i64: 8, 2048>}, {pipeline_mode = #tpu.pipeline_mode<synchronous>, transform_indices = @transform_1, window_bounds = array<i64: 2048, 128>}, {pipeline_mode = #tpu.pipeline_mode<synchronous>, transform_indices = @transform_2, window_bounds = array<i64: 1, 128>}, {transform_indices = @transform_3, window_bounds = array<i64: 8, 128>}]} {
    %c0 = arith.constant 0 : index
    %c0_0 = arith.constant 0 : index
    %0 = vector.load %arg1[%c0, %c0_0] : memref<8x2048xf32, #tpu.memory_space<vmem>>, vector<8x2048xf32>
    %c0_1 = arith.constant 0 : index
    %c0_2 = arith.constant 0 : index
    %1 = vector.load %arg2[%c0_1, %c0_2] : memref<2048x128xf32, #tpu.memory_space<vmem>>, vector<2048x128xf32>
    %cst = arith.constant dense<0.000000e+00> : vector<8x128xf32>
    %2 = tpu.matmul %0, %1, %cst {dimension_numbers = #tpu.dot_dimension_numbers<[1], [0], [0], [1], [0, 0, 1, 1], [], []>} : vector<8x2048xf32>, vector<2048x128xf32>, vector<8x128xf32> -> vector<8x128xf32>
    %c0_3 = arith.constant 0 : index
    %c0_4 = arith.constant 0 : index
    %3 = vector.load %arg3[%c0_3, %c0_4] : memref<1x128xf32, #tpu.memory_space<vmem>>, vector<1x128xf32>
    %4 = vector.broadcast %3 : vector<1x128xf32> to vector<8x128xf32>
    %5 = arith.addf %2, %4 : vector<8x128xf32>
    %c0_5 = arith.constant 0 : index
    %c0_6 = arith.constant 0 : index
    %6 = vector.load %arg4[%c0_5, %c0_6] : memref<8x128xf32, #tpu.memory_space<vmem>>, vector<8x128xf32>
    tpu.vector_store %arg4[%c0_5, %c0_6], %5 {strides = array<i32>} : memref<8x128xf32, #tpu.memory_space<vmem>>, vector<8x128xf32>,
    return
  }
  func.func @transform_0(%arg0: i32) -> (i32, i32) {
    %c0_i32 = arith.constant 0 : i32
    %c0_i32_0 = arith.constant 0 : i32
    return %arg0, %c0_i32 : i32, i32
  }
  func.func @transform_1(%arg0: i32) -> (i32, i32) {
    %c0_i32 = arith.constant 0 : i32
    %c0_i32_0 = arith.constant 0 : i32
    %c0_i32_1 = arith.constant 0 : i32
    return %c0_i32, %c0_i32_0 : i32, i32
  }
  func.func @transform_2(%arg0: i32) -> (i32, i32) {
    %c0_i32 = arith.constant 0 : i32
    %c0_i32_0 = arith.constant 0 : i32
    %c0_i32_1 = arith.constant 0 : i32
    return %c0_i32, %c0_i32_0 : i32, i32
  }
  func.func @transform_3(%arg0: i32) -> (i32, i32) {
    %c0_i32 = arith.constant 0 : i32
    %c0_i32_0 = arith.constant 0 : i32
    return %arg0, %c0_i32 : i32, i32
  }
}

</mosaic_0001>

<llo_original>
// kernel: tpu_custom_call.1
$region0: #{tpu_custom_call.1}
  #allocation0 [shape = 'u32[]', space=smem, size = 0x4, offset = 0x4, fixed_abs, tag = 'smem constant byte address 0x4 - core index']
  #allocation1 [shape = 'u32[72,128]{1,0:T(1,128)}', space=vmem, size = 0x9000, scoped, tag = 'internal scratch']
  %s0 = inlined_call_operand.hbm [shape: f32[16,2048], index: 0, kind: input, shape index: {}]
  %s1 = inlined_call_operand.hbm [shape: f32[2048,128], index: 1, kind: input, shape index: {}]
  %s2 = inlined_call_operand.vmem [shape: f32[1,128], index: 2, kind: input, shape index: {}]
  %s3 = inlined_call_operand.hbm [shape: f32[16,128], index: 3, kind: output, shape index: {}]
  %s4 = sld [smem:[#allocation0]]
  $region53: #{tpu_custom_call.1} parent=0
    _
  %s6 = ssub.s32 1, %s4
  %s7 = scalar_select 0, %s6, %s4
  $region1: #{tpu_custom_call.1} parent=0
    #allocation2 [shape = 'u8[131072]{0}', space=vmem, size = 0x20000, scoped, tag = 'input window, operand 0']
    #allocation3 [shape = 's32[2]{0}', space=sflag, size = 0x8, scoped, tag = 'scoped memory for tpu_custom_call.1']
    #allocation4 [shape = 's32[2]{0}', space=sflag, size = 0x8, scoped, tag = 'scoped memory for tpu_custom_call.1']
    #allocation5 [shape = 'u8[1048576]{0}', space=vmem, size = 0x100000, scoped, tag = 'input window, operand 1, single buffered']
    #allocation6 [shape = 's32[1]{0}', space=sflag, size = 0x4, scoped, tag = 'scoped memory for tpu_custom_call.1']
    #allocation7 [shape = 'u8[8192]{0}', space=vmem, size = 0x2000, scoped, tag = 'output window, operand 0']
    %8 = vsyncpa [#allocation3], 0
    %s9 = scalar_lea.sflag [#allocation3], 1
    %10 = vsyncpa %s9, 0
    %11 = vsyncpa [#allocation6], 0
    %12 = vsyncpa [#allocation4], 0
    %s13 = scalar_lea.sflag [#allocation4], 1
    %14 = vsyncpa %s13, 0
    loop: start=0, step=1, limit=4
    $region2: #{tpu_custom_call.1} parent=1 // loop_pre_header
      _
    $region3: #{tpu_custom_call.1} parent=1 // loop_header
      %s16 = sphi 0, %s20
      %p17 = scmp.ge.s32.totalorder %s16, 4
      %s26 = sphi 0, %s28
      %s29 = sphi 0, %s26
      %s30 = sphi 0, %s29
      %s46 = sphi 0, %s30
      %s50 = sphi 0, %s50
      %s52 = sphi 0, %s50
      %s53 = sphi 0, %s52
      %s67 = sphi 0, %s53
      %s71 = sphi 0, %s71
      %s73 = sphi 0, %s71
      %s74 = sphi 0, %s73
      %s88 = sphi 0, %s74
      %s94 = sphi 0, %s96
      %s97 = sphi 0, %s94
      %s98 = sphi 0, %s97
      %s114 = sphi 0, %s98
    $region4: #{tpu_custom_call.1} parent=1 // loop_header_branch
      %19 = sbr.rel (%p17) target = $region8
    $region5: #{tpu_custom_call.1} parent=1 // loop_body
      %s21 = ssub.s32 %s16, 1
      %s22 = ssub.s32 %s16, 2
      %s23 = sadd.s32 %s16, 1
      %s24 = ssub.s32 %s16, %s23
      %p25 = scmp.eq.s32.totalorder %s24, 0
      %s27 = sadd.s32 %s26, 1
      %s28 = scalar_select %p25, %s26, %s27
      %p31 = pneg %p25
      %p32 = scmp.eq.s32.totalorder %s16, 1
      %p33 = por %p31, %p32
      %p34 = scmp.ne.s32.totalorder %s26, %s29
      %p35 = scmp.eq.s32.totalorder %s16, 0
      %p36 = por %p34, %p35
      %p37 = scmp.ne.s32.totalorder %s26, %s29
      %p38 = scmp.eq.s32.totalorder %s21, 1
      %p39 = por %p37, %p38
      %p40 = scmp.ne.s32.totalorder %s29, %s30
      %p41 = scmp.eq.s32.totalorder %s21, 0
      %p42 = por %p40, %p41
      %p43 = scmp.ne.s32.totalorder %s29, %s30
      %p44 = scmp.eq.s32.totalorder %s22, 1
      %p45 = por %p43, %p44
      %p47 = scmp.ne.s32.totalorder %s30, %s46
      %p48 = scmp.eq.s32.totalorder %s22, 0
      %p49 = por %p47, %p48
      %s51 = sadd.s32 %s50, 1
      %p54 = scmp.eq.s32.totalorder %s16, 1
      %p55 = scmp.ne.s32.totalorder %s50, %s52
      %p56 = scmp.eq.s32.totalorder %s16, 0
      %p57 = por %p55, %p56
      %p58 = scmp.ne.s32.totalorder %s50, %s52
      %p59 = scmp.eq.s32.totalorder %s21, 1
      %p60 = por %p58, %p59
      %p61 = scmp.ne.s32.totalorder %s52, %s53
      %p62 = scmp.eq.s32.totalorder %s21, 0
      %p63 = por %p61, %p62
      %p64 = scmp.ne.s32.totalorder %s52, %s53
      %p65 = scmp.eq.s32.totalorder %s22, 1
      %p66 = por %p64, %p65
      %p68 = scmp.ne.s32.totalorder %s53, %s67
      %p69 = scmp.eq.s32.totalorder %s22, 0
      %p70 = por %p68, %p69
      %s72 = sadd.s32 %s71, 1
      %p75 = scmp.eq.s32.totalorder %s16, 1
      %p76 = scmp.ne.s32.totalorder %s71, %s73
      %p77 = scmp.eq.s32.totalorder %s16, 0
      %p78 = por %p76, %p77
      %p79 = scmp.ne.s32.totalorder %s71, %s73
      %p80 = scmp.eq.s32.totalorder %s21, 1
      %p81 = por %p79, %p80
      %p82 = scmp.ne.s32.totalorder %s73, %s74
      %p83 = scmp.eq.s32.totalorder %s21, 0
      %p84 = por %p82, %p83
      %p85 = scmp.ne.s32.totalorder %s73, %s74
      %p86 = scmp.eq.s32.totalorder %s22, 1
      %p87 = por %p85, %p86
      %p89 = scmp.ne.s32.totalorder %s74, %s88
      %p90 = scmp.eq.s32.totalorder %s22, 0
      %p91 = por %p89, %p90
      %s92 = ssub.s32 %s16, %s23
      %p93 = scmp.eq.s32.totalorder %s92, 0
      %s95 = sadd.s32 %s94, 1
      %s96 = scalar_select %p93, %s94, %s95
      %p99 = pneg %p93
      %p100 = scmp.eq.s32.totalorder %s16, 1
      %p101 = por %p99, %p100
      %p102 = scmp.ne.s32.totalorder %s94, %s97
      %p103 = scmp.eq.s32.totalorder %s16, 0
      %p104 = por %p102, %p103
      %p105 = scmp.ne.s32.totalorder %s94, %s97
      %p106 = scmp.eq.s32.totalorder %s21, 1
      %p107 = por %p105, %p106
      %p108 = scmp.ne.s32.totalorder %s97, %s98
      %p109 = scmp.eq.s32.totalorder %s21, 0
      %p110 = por %p108, %p109
      %p111 = scmp.ne.s32.totalorder %s97, %s98
      %p112 = scmp.eq.s32.totalorder %s22, 1
      %p113 = por %p111, %p112
      %p115 = scmp.ne.s32.totalorder %s98, %s114
      %p116 = scmp.eq.s32.totalorder %s22, 0
      %p117 = por %p115, %p116
      %p118 = scmp.le.s32.totalorder 1, %s16
      %p119 = scmp.lt.s32.totalorder %s16, 3
      %p120 = pnand %p118, %p119
      %p121 = pneg %p120
      // Predicated region
      $region9: #{tpu_custom_call.1} parent=5 // pred_check
        _
      $region10: #{tpu_custom_call.1} parent=5 // pred_check_branch
        %123 = sbr.rel (%p120) target = $region12
      $region11: #{tpu_custom_call.1} parent=5 // pred_region
        %s124 = ssub.s32 %s16, 1
        // Predicated region
        $region13: #{tpu_custom_call.1} parent=11 // pred_check
          %p125 = pneg %p63
        $region14: #{tpu_custom_call.1} parent=11 // pred_check_branch
          %127 = sbr.rel (%p125) target = $region16
        $region15: #{tpu_custom_call.1} parent=11 // pred_region
          %129 = vsyncadd [#allocation6], 0
          %s130 = sshll.u32 %s1, 4
          %s131 = int_to_ptr.hbm [resolvable:$true] %s130
          %s132 = sshll.u32 [#allocation5], 4
          %s133 = int_to_ptr.vmem [resolvable:$true] %s132
          %138 = dma.hbm_to_vmem [thread:$0]  %s131, 32768, %s133, [#allocation6], 128, 128, 8
        $region16: #{tpu_custom_call.1} parent=11 // pred_fallthru
          _
        // Predicated region
        $region17: #{tpu_custom_call.1} parent=11 // pred_check
          %p139 = pneg %p84
        $region18: #{tpu_custom_call.1} parent=11 // pred_check_branch
          %141 = sbr.rel (%p139) target = $region20
        $region19: #{tpu_custom_call.1} parent=11 // pred_region
          _
        $region20: #{tpu_custom_call.1} parent=11 // pred_fallthru
          _
      $region12: #{tpu_custom_call.1} parent=5 // pred_fallthru
        _
      %p142 = scmp.lt.s32.totalorder %s16, 2
      // Predicated region
      $region21: #{tpu_custom_call.1} parent=5 // pred_check
        %p143 = pneg %p142
      $region22: #{tpu_custom_call.1} parent=5 // pred_check_branch
        %145 = sbr.rel (%p143) target = $region24
      $region23: #{tpu_custom_call.1} parent=5 // pred_region
        // Predicated region
        $region25: #{tpu_custom_call.1} parent=23 // pred_check
          %p146 = pneg %p36
        $region26: #{tpu_custom_call.1} parent=23 // pred_check_branch
          %148 = sbr.rel (%p146) target = $region28
        $region27: #{tpu_custom_call.1} parent=23 // pred_region
          %s149 = sand.u32 %s26, 1
          %s150 = scalar_lea.sflag [#allocation3], %s149
          %s151 = sand.u32 %s26, 1
          %s152 = smul.addr %s151, 128
          %s153 = scalar_lea.vmem [#allocation2], %s152
          %155 = vsyncadd %s150, 0
          %s156 = smul.addr %s16, 16
          %s157 = smul.addr %s156, 8
          %s158 = scalar_lea.hbm %s0, %s157
          %s160 = sshll.u32 %s158, 4
          %s161 = int_to_ptr.hbm [resolvable:$true] %s160
          %s162 = sshll.u32 %s153, 4
          %s163 = int_to_ptr.vmem [resolvable:$true] %s162
          %165 = dma.hbm_to_vmem [thread:$0]  %s161, 2048, %s163, %s150
        $region28: #{tpu_custom_call.1} parent=23 // pred_fallthru
          _
      $region24: #{tpu_custom_call.1} parent=5 // pred_fallthru
        _
      %p166 = scmp.le.s32.totalorder 1, %s16
      %p167 = scmp.lt.s32.totalorder %s16, 3
      %p168 = pnand %p166, %p167
      %p169 = pneg %p168
      // Predicated region
      $region29: #{tpu_custom_call.1} parent=5 // pred_check
        _
      $region30: #{tpu_custom_call.1} parent=5 // pred_check_branch
        %171 = sbr.rel (%p168) target = $region32
      $region31: #{tpu_custom_call.1} parent=5 // pred_region
        %s172 = ssub.s32 %s16, 1
        %s173 = sand.u32 %s29, 1
        %s174 = scalar_lea.sflag [#allocation3], %s173
        %s175 = sand.u32 %s29, 1
        %s176 = smul.addr %s175, 128
        %s177 = scalar_lea.vmem [#allocation2], %s176
        // Predicated region
        $region33: #{tpu_custom_call.1} parent=31 // pred_check
          %p178 = pneg %p42
        $region34: #{tpu_custom_call.1} parent=31 // pred_check_branch
          %180 = sbr.rel (%p178) target = $region36
        $region35: #{tpu_custom_call.1} parent=31 // pred_region
          %182 = dma.done %s174, 2048
        $region36: #{tpu_custom_call.1} parent=31 // pred_fallthru
          _
        // Predicated region
        $region37: #{tpu_custom_call.1} parent=31 // pred_check
          %p183 = pneg %p63
        $region38: #{tpu_custom_call.1} parent=31 // pred_check_branch
          %185 = sbr.rel (%p183) target = $region40
        $region39: #{tpu_custom_call.1} parent=31 // pred_region
          %187 = dma.done [#allocation6], 32768
        $region40: #{tpu_custom_call.1} parent=31 // pred_fallthru
          _
        %s188 = sand.u32 %s29, 1
        %s189 = scalar_lea.sflag [#allocation3], %s188
        %s190 = sand.u32 %s29, 1
        %s191 = smul.addr %s190, 128
        %s192 = scalar_lea.vmem [#allocation2], %s191
        %p193 = pneg %p42
        %p194 = pneg %p39
        %p195 = pneg %p63
        %p196 = pneg %p60
        %p197 = pneg %p84
        %p198 = pneg %p81
        %p199 = pneg %p110
        %p200 = pneg %p107
        %s201 = sand.u32 %s97, 1
        %s202 = scalar_lea.sflag [#allocation4], %s201
        %s203 = sand.u32 %s97, 1
        %s204 = smul.addr %s203, 8
        %s205 = scalar_lea.vmem [#allocation7], %s204
        %v206 = vld [vmem:[%s177] sm:$0xff]
        %v207 = vld [vmem:[%s177 + $0x8] sm:$0xff]
        %v208 = vld [vmem:[%s177 + $0x10] sm:$0xff]
        %v209 = vld [vmem:[%s177 + $0x18] sm:$0xff]
        %v210 = vld [vmem:[%s177 + $0x20] sm:$0xff]
        %v211 = vld [vmem:[%s177 + $0x28] sm:$0xff]
        %v212 = vld [vmem:[%s177 + $0x30] sm:$0xff]
        %v213 = vld [vmem:[%s177 + $0x38] sm:$0xff]
        %v214 = vld [vmem:[%s177 + $0x40] sm:$0xff]
        %v215 = vld [vmem:[%s177 + $0x48] sm:$0xff]
        %v216 = vld [vmem:[%s177 + $0x50] sm:$0xff]
        %v217 = vld [vmem:[%s177 + $0x58] sm:$0xff]
        %v218 = vld [vmem:[%s177 + $0x60] sm:$0xff]
        %v219 = vld [vmem:[%s177 + $0x68] sm:$0xff]
        %v220 = vld [vmem:[%s177 + $0x70] sm:$0xff]
        %v221 = vld [vmem:[%s177 + $0x78] sm:$0xff]
        %v222 = vld [vmem:[#allocation5] sm:$0xff]
        %v223 = vld [vmem:[#allocation5 + $0x8] sm:$0xff]
        %v224 = vld [vmem:[#allocation5 + $0x10] sm:$0xff]
        %v225 = vld [vmem:[#allocation5 + $0x18] sm:$0xff]
        %v226 = vld [vmem:[#allocation5 + $0x20] sm:$0xff]
        %v227 = vld [vmem:[#allocation5 + $0x28] sm:$0xff]
        %v228 = vld [vmem:[#allocation5 + $0x30] sm:$0xff]
        %v229 = vld [vmem:[#allocation5 + $0x38] sm:$0xff]
        %v230 = vld [vmem:[#allocation5 + $0x40] sm:$0xff]
        %v231 = vld [vmem:[#allocation5 + $0x48] sm:$0xff]
        %v232 = vld [vmem:[#allocation5 + $0x50] sm:$0xff]
        %v233 = vld [vmem:[#allocation5 + $0x58] sm:$0xff]
        %v234 = vld [vmem:[#allocation5 + $0x60] sm:$0xff]
        %v235 = vld [vmem:[#allocation5 + $0x68] sm:$0xff]
        %v236 = vld [vmem:[#allocation5 + $0x70] sm:$0xff]
        %v237 = vld [vmem:[#allocation5 + $0x78] sm:$0xff]
        %v238 = vld [vmem:[#allocation5 + $0x80] sm:$0xff]
        %v239 = vld [vmem:[#allocation5 + $0x88] sm:$0xff]
        %v240 = vld [vmem:[#allocation5 + $0x90] sm:$0xff]
        %v241 = vld [vmem:[#allocation5 + $0x98] sm:$0xff]
        %v242 = vld [vmem:[#allocation5 + $0xa0] sm:$0xff]
        %v243 = vld [vmem:[#allocation5 + $0xa8] sm:$0xff]
        %v244 = vld [vmem:[#allocation5 + $0xb0] sm:$0xff]
        %v245 = vld [vmem:[#allocation5 + $0xb8] sm:$0xff]
        %v246 = vld [vmem:[#allocation5 + $0xc0] sm:$0xff]
        %v247 = vld [vmem:[#allocation5 + $0xc8] sm:$0xff]
        %v248 = vld [vmem:[#allocation5 + $0xd0] sm:$0xff]
        %v249 = vld [vmem:[#allocation5 + $0xd8] sm:$0xff]
        %v250 = vld [vmem:[#allocation5 + $0xe0] sm:$0xff]
        %v251 = vld [vmem:[#allocation5 + $0xe8] sm:$0xff]
        %v252 = vld [vmem:[#allocation5 + $0xf0] sm:$0xff]
        %v253 = vld [vmem:[#allocation5 + $0xf8] sm:$0xff]
        %v254 = vld [vmem:[#allocation5 + $0x100] sm:$0xff]
        %v255 = vld [vmem:[#allocation5 + $0x108] sm:$0xff]
        %v256 = vld [vmem:[#allocation5 + $0x110] sm:$0xff]
        %v257 = vld [vmem:[#allocation5 + $0x118] sm:$0xff]
        %v258 = vld [vmem:[#allocation5 + $0x120] sm:$0xff]
        %v259 = vld [vmem:[#allocation5 + $0x128] sm:$0xff]
        %v260 = vld [vmem:[#allocation5 + $0x130] sm:$0xff]
        %v261 = vld [vmem:[#allocation5 + $0x138] sm:$0xff]
        %v262 = vld [vmem:[#allocation5 + $0x140] sm:$0xff]
        %v263 = vld [vmem:[#allocation5 + $0x148] sm:$0xff]
        %v264 = vld [vmem:[#allocation5 + $0x150] sm:$0xff]
        %v265 = vld [vmem:[#allocation5 + $0x158] sm:$0xff]
        %v266 = vld [vmem:[#allocation5 + $0x160] sm:$0xff]
        %v267 = vld [vmem:[#allocation5 + $0x168] sm:$0xff]
        %v268 = vld [vmem:[#allocation5 + $0x170] sm:$0xff]
        %v269 = vld [vmem:[#allocation5 + $0x178] sm:$0xff]
        %v270 = vld [vmem:[#allocation5 + $0x180] sm:$0xff]
        %v271 = vld [vmem:[#allocation5 + $0x188] sm:$0xff]
        %v272 = vld [vmem:[#allocation5 + $0x190] sm:$0xff]
        %v273 = vld [vmem:[#allocation5 + $0x198] sm:$0xff]
        %v274 = vld [vmem:[#allocation5 + $0x1a0] sm:$0xff]
        %v275 = vld [vmem:[#allocation5 + $0x1a8] sm:$0xff]
        %v276 = vld [vmem:[#allocation5 + $0x1b0] sm:$0xff]
        %v277 = vld [vmem:[#allocation5 + $0x1b8] sm:$0xff]
        %v278 = vld [vmem:[#allocation5 + $0x1c0] sm:$0xff]
        %v279 = vld [vmem:[#allocation5 + $0x1c8] sm:$0xff]
        %v280 = vld [vmem:[#allocation5 + $0x1d0] sm:$0xff]
        %v281 = vld [vmem:[#allocation5 + $0x1d8] sm:$0xff]
        %v282 = vld [vmem:[#allocation5 + $0x1e0] sm:$0xff]
        %v283 = vld [vmem:[#allocation5 + $0x1e8] sm:$0xff]
        %v284 = vld [vmem:[#allocation5 + $0x1f0] sm:$0xff]
        %v285 = vld [vmem:[#allocation5 + $0x1f8] sm:$0xff]
        %v286 = vld [vmem:[#allocation5 + $0x200] sm:$0xff]
        %v287 = vld [vmem:[#allocation5 + $0x208] sm:$0xff]
        %v288 = vld [vmem:[#allocation5 + $0x210] sm:$0xff]
        %v289 = vld [vmem:[#allocation5 + $0x218] sm:$0xff]
        %v290 = vld [vmem:[#allocation5 + $0x220] sm:$0xff]
        %v291 = vld [vmem:[#allocation5 + $0x228] sm:$0xff]
        %v292 = vld [vmem:[#allocation5 + $0x230] sm:$0xff]
        %v293 = vld [vmem:[#allocation5 + $0x238] sm:$0xff]
        %v294 = vld [vmem:[#allocation5 + $0x240] sm:$0xff]
        %v295 = vld [vmem:[#allocation5 + $0x248] sm:$0xff]
        %v296 = vld [vmem:[#allocation5 + $0x250] sm:$0xff]
        %v297 = vld [vmem:[#allocation5 + $0x258] sm:$0xff]
        %v298 = vld [vmem:[#allocation5 + $0x260] sm:$0xff]
        %v299 = vld [vmem:[#allocation5 + $0x268] sm:$0xff]
        %v300 = vld [vmem:[#allocation5 + $0x270] sm:$0xff]
        %v301 = vld [vmem:[#allocation5 + $0x278] sm:$0xff]
        %v302 = vld [vmem:[#allocation5 + $0x280] sm:$0xff]
        %v303 = vld [vmem:[#allocation5 + $0x288] sm:$0xff]
        %v304 = vld [vmem:[#allocation5 + $0x290] sm:$0xff]
        %v305 = vld [vmem:[#allocation5 + $0x298] sm:$0xff]
        %v306 = vld [vmem:[#allocation5 + $0x2a0] sm:$0xff]
        %v307 = vld [vmem:[#allocation5 + $0x2a8] sm:$0xff]
        %v308 = vld [vmem:[#allocation5 + $0x2b0] sm:$0xff]
        %v309 = vld [vmem:[#allocation5 + $0x2b8] sm:$0xff]
        %v310 = vld [vmem:[#allocation5 + $0x2c0] sm:$0xff]
        %v311 = vld [vmem:[#allocation5 + $0x2c8] sm:$0xff]
        %v312 = vld [vmem:[#allocation5 + $0x2d0] sm:$0xff]
        %v313 = vld [vmem:[#allocation5 + $0x2d8] sm:$0xff]
        %v314 = vld [vmem:[#allocation5 + $0x2e0] sm:$0xff]
        %v315 = vld [vmem:[#allocation5 + $0x2e8] sm:$0xff]
        %v316 = vld [vmem:[#allocation5 + $0x2f0] sm:$0xff]
        %v317 = vld [vmem:[#allocation5 + $0x2f8] sm:$0xff]
        %v318 = vld [vmem:[#allocation5 + $0x300] sm:$0xff]
        %v319 = vld [vmem:[#allocation5 + $0x308] sm:$0xff]
        %v320 = vld [vmem:[#allocation5 + $0x310] sm:$0xff]
        %v321 = vld [vmem:[#allocation5 + $0x318] sm:$0xff]
        %v322 = vld [vmem:[#allocation5 + $0x320] sm:$0xff]
        %v323 = vld [vmem:[#allocation5 + $0x328] sm:$0xff]
        %v324 = vld [vmem:[#allocation5 + $0x330] sm:$0xff]
        %v325 = vld [vmem:[#allocation5 + $0x338] sm:$0xff]
        %v326 = vld [vmem:[#allocation5 + $0x340] sm:$0xff]
        %v327 = vld [vmem:[#allocation5 + $0x348] sm:$0xff]
        %v328 = vld [vmem:[#allocation5 + $0x350] sm:$0xff]
        %v329 = vld [vmem:[#allocation5 + $0x358] sm:$0xff]
        %v330 = vld [vmem:[#allocation5 + $0x360] sm:$0xff]
        %v331 = vld [vmem:[#allocation5 + $0x368] sm:$0xff]
        %v332 = vld [vmem:[#allocation5 + $0x370] sm:$0xff]
        %v333 = vld [vmem:[#allocation5 + $0x378] sm:$0xff]
        %v334 = vld [vmem:[#allocation5 + $0x380] sm:$0xff]
        %v335 = vld [vmem:[#allocation5 + $0x388] sm:$0xff]
        %v336 = vld [vmem:[#allocation5 + $0x390] sm:$0xff]
        %v337 = vld [vmem:[#allocation5 + $0x398] sm:$0xff]
        %v338 = vld [vmem:[#allocation5 + $0x3a0] sm:$0xff]
        %v339 = vld [vmem:[#allocation5 + $0x3a8] sm:$0xff]
        %v340 = vld [vmem:[#allocation5 + $0x3b0] sm:$0xff]
        %v341 = vld [vmem:[#allocation5 + $0x3b8] sm:$0xff]
        %v342 = vld [vmem:[#allocation5 + $0x3c0] sm:$0xff]
        %v343 = vld [vmem:[#allocation5 + $0x3c8] sm:$0xff]
        %v344 = vld [vmem:[#allocation5 + $0x3d0] sm:$0xff]
        %v345 = vld [vmem:[#allocation5 + $0x3d8] sm:$0xff]
        %v346 = vld [vmem:[#allocation5 + $0x3e0] sm:$0xff]
        %v347 = vld [vmem:[#allocation5 + $0x3e8] sm:$0xff]
        %v348 = vld [vmem:[#allocation5 + $0x3f0] sm:$0xff]
        %v349 = vld [vmem:[#allocation5 + $0x3f8] sm:$0xff]
        %v350 = vld [vmem:[#allocation5 + $0x400] sm:$0xff]
        %v351 = vld [vmem:[#allocation5 + $0x408] sm:$0xff]
        %v352 = vld [vmem:[#allocation5 + $0x410] sm:$0xff]
        %v353 = vld [vmem:[#allocation5 + $0x418] sm:$0xff]
        %v354 = vld [vmem:[#allocation5 + $0x420] sm:$0xff]
        %v355 = vld [vmem:[#allocation5 + $0x428] sm:$0xff]
        %v356 = vld [vmem:[#allocation5 + $0x430] sm:$0xff]
        %v357 = vld [vmem:[#allocation5 + $0x438] sm:$0xff]
        %v358 = vld [vmem:[#allocation5 + $0x440] sm:$0xff]
        %v359 = vld [vmem:[#allocation5 + $0x448] sm:$0xff]
        %v360 = vld [vmem:[#allocation5 + $0x450] sm:$0xff]
        %v361 = vld [vmem:[#allocation5 + $0x458] sm:$0xff]
        %v362 = vld [vmem:[#allocation5 + $0x460] sm:$0xff]
        %v363 = vld [vmem:[#allocation5 + $0x468] sm:$0xff]
        %v364 = vld [vmem:[#allocation5 + $0x470] sm:$0xff]
        %v365 = vld [vmem:[#allocation5 + $0x478] sm:$0xff]
        %v366 = vld [vmem:[#allocation5 + $0x480] sm:$0xff]
        %v367 = vld [vmem:[#allocation5 + $0x488] sm:$0xff]
        %v368 = vld [vmem:[#allocation5 + $0x490] sm:$0xff]
        %v369 = vld [vmem:[#allocation5 + $0x498] sm:$0xff]
        %v370 = vld [vmem:[#allocation5 + $0x4a0] sm:$0xff]
        %v371 = vld [vmem:[#allocation5 + $0x4a8] sm:$0xff]
        %v372 = vld [vmem:[#allocation5 + $0x4b0] sm:$0xff]
        %v373 = vld [vmem:[#allocation5 + $0x4b8] sm:$0xff]
        %v374 = vld [vmem:[#allocation5 + $0x4c0] sm:$0xff]
        %v375 = vld [vmem:[#allocation5 + $0x4c8] sm:$0xff]
        %v376 = vld [vmem:[#allocation5 + $0x4d0] sm:$0xff]
        %v377 = vld [vmem:[#allocation5 + $0x4d8] sm:$0xff]
        %v378 = vld [vmem:[#allocation5 + $0x4e0] sm:$0xff]
        %v379 = vld [vmem:[#allocation5 + $0x4e8] sm:$0xff]
        %v380 = vld [vmem:[#allocation5 + $0x4f0] sm:$0xff]
        %v381 = vld [vmem:[#allocation5 + $0x4f8] sm:$0xff]
        %v382 = vld [vmem:[#allocation5 + $0x500] sm:$0xff]
        %v383 = vld [vmem:[#allocation5 + $0x508] sm:$0xff]
        %v384 = vld [vmem:[#allocation5 + $0x510] sm:$0xff]
        %v385 = vld [vmem:[#allocation5 + $0x518] sm:$0xff]
        %v386 = vld [vmem:[#allocation5 + $0x520] sm:$0xff]
        %v387 = vld [vmem:[#allocation5 + $0x528] sm:$0xff]
        %v388 = vld [vmem:[#allocation5 + $0x530] sm:$0xff]
        %v389 = vld [vmem:[#allocation5 + $0x538] sm:$0xff]
        %v390 = vld [vmem:[#allocation5 + $0x540] sm:$0xff]
        %v391 = vld [vmem:[#allocation5 + $0x548] sm:$0xff]
        %v392 = vld [vmem:[#allocation5 + $0x550] sm:$0xff]
        %v393 = vld [vmem:[#allocation5 + $0x558] sm:$0xff]
        %v394 = vld [vmem:[#allocation5 + $0x560] sm:$0xff]
        %v395 = vld [vmem:[#allocation5 + $0x568] sm:$0xff]
        %v396 = vld [vmem:[#allocation5 + $0x570] sm:$0xff]
        %v397 = vld [vmem:[#allocation5 + $0x578] sm:$0xff]
        %v398 = vld [vmem:[#allocation5 + $0x580] sm:$0xff]
        %v399 = vld [vmem:[#allocation5 + $0x588] sm:$0xff]
        %v400 = vld [vmem:[#allocation5 + $0x590] sm:$0xff]
        %v401 = vld [vmem:[#allocation5 + $0x598] sm:$0xff]
        %v402 = vld [vmem:[#allocation5 + $0x5a0] sm:$0xff]
        %v403 = vld [vmem:[#allocation5 + $0x5a8] sm:$0xff]
        %v404 = vld [vmem:[#allocation5 + $0x5b0] sm:$0xff]
        %v405 = vld [vmem:[#allocation5 + $0x5b8] sm:$0xff]
        %v406 = vld [vmem:[#allocation5 + $0x5c0] sm:$0xff]
        %v407 = vld [vmem:[#allocation5 + $0x5c8] sm:$0xff]
        %v408 = vld [vmem:[#allocation5 + $0x5d0] sm:$0xff]
        %v409 = vld [vmem:[#allocation5 + $0x5d8] sm:$0xff]
        %v410 = vld [vmem:[#allocation5 + $0x5e0] sm:$0xff]
        %v411 = vld [vmem:[#allocation5 + $0x5e8] sm:$0xff]
        %v412 = vld [vmem:[#allocation5 + $0x5f0] sm:$0xff]
        %v413 = vld [vmem:[#allocation5 + $0x5f8] sm:$0xff]
        %v414 = vld [vmem:[#allocation5 + $0x600] sm:$0xff]
        %v415 = vld [vmem:[#allocation5 + $0x608] sm:$0xff]
        %v416 = vld [vmem:[#allocation5 + $0x610] sm:$0xff]
        %v417 = vld [vmem:[#allocation5 + $0x618] sm:$0xff]
        %v418 = vld [vmem:[#allocation5 + $0x620] sm:$0xff]
        %v419 = vld [vmem:[#allocation5 + $0x628] sm:$0xff]
        %v420 = vld [vmem:[#allocation5 + $0x630] sm:$0xff]
        %v421 = vld [vmem:[#allocation5 + $0x638] sm:$0xff]
        %v422 = vld [vmem:[#allocation5 + $0x640] sm:$0xff]
        %v423 = vld [vmem:[#allocation5 + $0x648] sm:$0xff]
        %v424 = vld [vmem:[#allocation5 + $0x650] sm:$0xff]
        %v425 = vld [vmem:[#allocation5 + $0x658] sm:$0xff]
        %v426 = vld [vmem:[#allocation5 + $0x660] sm:$0xff]
        %v427 = vld [vmem:[#allocation5 + $0x668] sm:$0xff]
        %v428 = vld [vmem:[#allocation5 + $0x670] sm:$0xff]
        %v429 = vld [vmem:[#allocation5 + $0x678] sm:$0xff]
        %v430 = vld [vmem:[#allocation5 + $0x680] sm:$0xff]
        %v431 = vld [vmem:[#allocation5 + $0x688] sm:$0xff]
        %v432 = vld [vmem:[#allocation5 + $0x690] sm:$0xff]
        %v433 = vld [vmem:[#allocation5 + $0x698] sm:$0xff]
        %v434 = vld [vmem:[#allocation5 + $0x6a0] sm:$0xff]
        %v435 = vld [vmem:[#allocation5 + $0x6a8] sm:$0xff]
        %v436 = vld [vmem:[#allocation5 + $0x6b0] sm:$0xff]
        %v437 = vld [vmem:[#allocation5 + $0x6b8] sm:$0xff]
        %v438 = vld [vmem:[#allocation5 + $0x6c0] sm:$0xff]
        %v439 = vld [vmem:[#allocation5 + $0x6c8] sm:$0xff]
        %v440 = vld [vmem:[#allocation5 + $0x6d0] sm:$0xff]
        %v441 = vld [vmem:[#allocation5 + $0x6d8] sm:$0xff]
        %v442 = vld [vmem:[#allocation5 + $0x6e0] sm:$0xff]
        %v443 = vld [vmem:[#allocation5 + $0x6e8] sm:$0xff]
        %v444 = vld [vmem:[#allocation5 + $0x6f0] sm:$0xff]
        %v445 = vld [vmem:[#allocation5 + $0x6f8] sm:$0xff]
        %v446 = vld [vmem:[#allocation5 + $0x700] sm:$0xff]
        %v447 = vld [vmem:[#allocation5 + $0x708] sm:$0xff]
        %v448 = vld [vmem:[#allocation5 + $0x710] sm:$0xff]
        %v449 = vld [vmem:[#allocation5 + $0x718] sm:$0xff]
        %v450 = vld [vmem:[#allocation5 + $0x720] sm:$0xff]
        %v451 = vld [vmem:[#allocation5 + $0x728] sm:$0xff]
        %v452 = vld [vmem:[#allocation5 + $0x730] sm:$0xff]
        %v453 = vld [vmem:[#allocation5 + $0x738] sm:$0xff]
        %v454 = vld [vmem:[#allocation5 + $0x740] sm:$0xff]
        %v455 = vld [vmem:[#allocation5 + $0x748] sm:$0xff]
        %v456 = vld [vmem:[#allocation5 + $0x750] sm:$0xff]
        %v457 = vld [vmem:[#allocation5 + $0x758] sm:$0xff]
        %v458 = vld [vmem:[#allocation5 + $0x760] sm:$0xff]
        %v459 = vld [vmem:[#allocation5 + $0x768] sm:$0xff]
        %v460 = vld [vmem:[#allocation5 + $0x770] sm:$0xff]
        %v461 = vld [vmem:[#allocation5 + $0x778] sm:$0xff]
        %v462 = vld [vmem:[#allocation5 + $0x780] sm:$0xff]
        %v463 = vld [vmem:[#allocation5 + $0x788] sm:$0xff]
        %v464 = vld [vmem:[#allocation5 + $0x790] sm:$0xff]
        %v465 = vld [vmem:[#allocation5 + $0x798] sm:$0xff]
        %v466 = vld [vmem:[#allocation5 + $0x7a0] sm:$0xff]
        %v467 = vld [vmem:[#allocation5 + $0x7a8] sm:$0xff]
        %v468 = vld [vmem:[#allocation5 + $0x7b0] sm:$0xff]
        %v469 = vld [vmem:[#allocation5 + $0x7b8] sm:$0xff]
        %v470 = vld [vmem:[#allocation5 + $0x7c0] sm:$0xff]
        %v471 = vld [vmem:[#allocation5 + $0x7c8] sm:$0xff]
        %v472 = vld [vmem:[#allocation5 + $0x7d0] sm:$0xff]
        %v473 = vld [vmem:[#allocation5 + $0x7d8] sm:$0xff]
        %v474 = vld [vmem:[#allocation5 + $0x7e0] sm:$0xff]
        %v475 = vld [vmem:[#allocation5 + $0x7e8] sm:$0xff]
        %v476 = vld [vmem:[#allocation5 + $0x7f0] sm:$0xff]
        %v477 = vld [vmem:[#allocation5 + $0x7f8] sm:$0xff]
        %v478 = vld [vmem:[%s2] sm:$0x1]
        %v480 = vperm.slane %v478, 0
        %482 = vmatpush.msra.mxu0 %v237
        %483 = vmatpush.msra.mxu0 %v236
        %484 = vmatpush.msra.mxu0 %v235
        %485 = vmatpush.msra.mxu0 %v234
        %486 = vmatpush.msra.mxu0 %v233
        %487 = vmatpush.msra.mxu0 %v232
        %488 = vmatpush.msra.mxu0 %v231
        %489 = vmatpush.msra.mxu0 %v230
        %490 = vmatpush.msra.mxu0 %v229
        %491 = vmatpush.msra.mxu0 %v228
        %492 = vmatpush.msra.mxu0 %v227
        %493 = vmatpush.msra.mxu0 %v226
        %494 = vmatpush.msra.mxu0 %v225
        %495 = vmatpush.msra.mxu0 %v224
        %496 = vmatpush.msra.mxu0 %v223
        %497 = vmatpush.msra.mxu0 %v222
        %498 = vmatmul.f32.gmra.mxu0 %v206
        %v499 = vpop.f32.mrf.mxu0
        %v500 = vadd.f32 %v480, %v499
        %501 = vdwg.mxu0
        %502 = vmatpush.msra.mxu0 %v253
        %503 = vmatpush.msra.mxu0 %v252
        %504 = vmatpush.msra.mxu0 %v251
        %505 = vmatpush.msra.mxu0 %v250
        %506 = vmatpush.msra.mxu0 %v249
        %507 = vmatpush.msra.mxu0 %v248
        %508 = vmatpush.msra.mxu0 %v247
        %509 = vmatpush.msra.mxu0 %v246
        %510 = vmatpush.msra.mxu0 %v245
        %511 = vmatpush.msra.mxu0 %v244
        %512 = vmatpush.msra.mxu0 %v243
        %513 = vmatpush.msra.mxu0 %v242
        %514 = vmatpush.msra.mxu0 %v241
        %515 = vmatpush.msra.mxu0 %v240
        %516 = vmatpush.msra.mxu0 %v239
        %517 = vmatpush.msra.mxu0 %v238
        %518 = vmatmul.f32.gmra.mxu0 %v207
        %v519 = vpop.f32.mrf.mxu0
        %v520 = vadd.f32 %v500, %v519
        %521 = vdwg.mxu0
        %522 = vmatpush.msra.mxu0 %v269
        %523 = vmatpush.msra.mxu0 %v268
        %524 = vmatpush.msra.mxu0 %v267
        %525 = vmatpush.msra.mxu0 %v266
        %526 = vmatpush.msra.mxu0 %v265
        %527 = vmatpush.msra.mxu0 %v264
        %528 = vmatpush.msra.mxu0 %v263
        %529 = vmatpush.msra.mxu0 %v262
        %530 = vmatpush.msra.mxu0 %v261
        %531 = vmatpush.msra.mxu0 %v260
        %532 = vmatpush.msra.mxu0 %v259
        %533 = vmatpush.msra.mxu0 %v258
        %534 = vmatpush.msra.mxu0 %v257
        %535 = vmatpush.msra.mxu0 %v256
        %536 = vmatpush.msra.mxu0 %v255
        %537 = vmatpush.msra.mxu0 %v254
        %538 = vmatmul.f32.gmra.mxu0 %v208
        %v539 = vpop.f32.mrf.mxu0
        %v540 = vadd.f32 %v520, %v539
        %541 = vdwg.mxu0
        %542 = vmatpush.msra.mxu0 %v285
        %543 = vmatpush.msra.mxu0 %v284
        %544 = vmatpush.msra.mxu0 %v283
        %545 = vmatpush.msra.mxu0 %v282
        %546 = vmatpush.msra.mxu0 %v281
        %547 = vmatpush.msra.mxu0 %v280
        %548 = vmatpush.msra.mxu0 %v279
        %549 = vmatpush.msra.mxu0 %v278
        %550 = vmatpush.msra.mxu0 %v277
        %551 = vmatpush.msra.mxu0 %v276
        %552 = vmatpush.msra.mxu0 %v275
        %553 = vmatpush.msra.mxu0 %v274
        %554 = vmatpush.msra.mxu0 %v273
        %555 = vmatpush.msra.mxu0 %v272
        %556 = vmatpush.msra.mxu0 %v271
        %557 = vmatpush.msra.mxu0 %v270
        %558 = vmatmul.f32.gmra.mxu0 %v209
        %v559 = vpop.f32.mrf.mxu0
        %v560 = vadd.f32 %v540, %v559
        %561 = vdwg.mxu0
        %562 = vmatpush.msra.mxu0 %v301
        %563 = vmatpush.msra.mxu0 %v300
        %564 = vmatpush.msra.mxu0 %v299
        %565 = vmatpush.msra.mxu0 %v298
        %566 = vmatpush.msra.mxu0 %v297
        %567 = vmatpush.msra.mxu0 %v296
        %568 = vmatpush.msra.mxu0 %v295
        %569 = vmatpush.msra.mxu0 %v294
        %570 = vmatpush.msra.mxu0 %v293
        %571 = vmatpush.msra.mxu0 %v292
        %572 = vmatpush.msra.mxu0 %v291
        %573 = vmatpush.msra.mxu0 %v290
        %574 = vmatpush.msra.mxu0 %v289
        %575 = vmatpush.msra.mxu0 %v288
        %576 = vmatpush.msra.mxu0 %v287
        %577 = vmatpush.msra.mxu0 %v286
        %578 = vmatmul.f32.gmra.mxu0 %v210
        %v579 = vpop.f32.mrf.mxu0
        %v580 = vadd.f32 %v560, %v579
        %581 = vdwg.mxu0
        %582 = vmatpush.msra.mxu0 %v317
        %583 = vmatpush.msra.mxu0 %v316
        %584 = vmatpush.msra.mxu0 %v315
        %585 = vmatpush.msra.mxu0 %v314
        %586 = vmatpush.msra.mxu0 %v313
        %587 = vmatpush.msra.mxu0 %v312
        %588 = vmatpush.msra.mxu0 %v311
        %589 = vmatpush.msra.mxu0 %v310
        %590 = vmatpush.msra.mxu0 %v309
        %591 = vmatpush.msra.mxu0 %v308
        %592 = vmatpush.msra.mxu0 %v307
        %593 = vmatpush.msra.mxu0 %v306
        %594 = vmatpush.msra.mxu0 %v305
        %595 = vmatpush.msra.mxu0 %v304
        %596 = vmatpush.msra.mxu0 %v303
        %597 = vmatpush.msra.mxu0 %v302
        %598 = vmatmul.f32.gmra.mxu0 %v211
        %v599 = vpop.f32.mrf.mxu0
        %v600 = vadd.f32 %v580, %v599
        %601 = vdwg.mxu0
        %602 = vmatpush.msra.mxu0 %v333
        %603 = vmatpush.msra.mxu0 %v332
        %604 = vmatpush.msra.mxu0 %v331
        %605 = vmatpush.msra.mxu0 %v330
        %606 = vmatpush.msra.mxu0 %v329
        %607 = vmatpush.msra.mxu0 %v328
        %608 = vmatpush.msra.mxu0 %v327
        %609 = vmatpush.msra.mxu0 %v326
        %610 = vmatpush.msra.mxu0 %v325
        %611 = vmatpush.msra.mxu0 %v324
        %612 = vmatpush.msra.mxu0 %v323
        %613 = vmatpush.msra.mxu0 %v322
        %614 = vmatpush.msra.mxu0 %v321
        %615 = vmatpush.msra.mxu0 %v320
        %616 = vmatpush.msra.mxu0 %v319
        %617 = vmatpush.msra.mxu0 %v318
        %618 = vmatmul.f32.gmra.mxu0 %v212
        %v619 = vpop.f32.mrf.mxu0
        %v620 = vadd.f32 %v600, %v619
        %621 = vdwg.mxu0
        %622 = vmatpush.msra.mxu0 %v349
        %623 = vmatpush.msra.mxu0 %v348
        %624 = vmatpush.msra.mxu0 %v347
        %625 = vmatpush.msra.mxu0 %v346
        %626 = vmatpush.msra.mxu0 %v345
        %627 = vmatpush.msra.mxu0 %v344
        %628 = vmatpush.msra.mxu0 %v343
        %629 = vmatpush.msra.mxu0 %v342
        %630 = vmatpush.msra.mxu0 %v341
        %631 = vmatpush.msra.mxu0 %v340
        %632 = vmatpush.msra.mxu0 %v339
        %633 = vmatpush.msra.mxu0 %v338
        %634 = vmatpush.msra.mxu0 %v337
        %635 = vmatpush.msra.mxu0 %v336
        %636 = vmatpush.msra.mxu0 %v335
        %637 = vmatpush.msra.mxu0 %v334
        %638 = vmatmul.f32.gmra.mxu0 %v213
        %v639 = vpop.f32.mrf.mxu0
        %v640 = vadd.f32 %v620, %v639
        %641 = vdwg.mxu0
        %642 = vmatpush.msra.mxu0 %v365
        %643 = vmatpush.msra.mxu0 %v364
        %644 = vmatpush.msra.mxu0 %v363
        %645 = vmatpush.msra.mxu0 %v362
        %646 = vmatpush.msra.mxu0 %v361
        %647 = vmatpush.msra.mxu0 %v360
        %648 = vmatpush.msra.mxu0 %v359
        %649 = vmatpush.msra.mxu0 %v358
        %650 = vmatpush.msra.mxu0 %v357
        %651 = vmatpush.msra.mxu0 %v356
        %652 = vmatpush.msra.mxu0 %v355
        %653 = vmatpush.msra.mxu0 %v354
        %654 = vmatpush.msra.mxu0 %v353
        %655 = vmatpush.msra.mxu0 %v352
        %656 = vmatpush.msra.mxu0 %v351
        %657 = vmatpush.msra.mxu0 %v350
        %658 = vmatmul.f32.gmra.mxu0 %v214
        %v659 = vpop.f32.mrf.mxu0
        %v660 = vadd.f32 %v640, %v659
        %661 = vdwg.mxu0
        %662 = vmatpush.msra.mxu0 %v381
        %663 = vmatpush.msra.mxu0 %v380
        %664 = vmatpush.msra.mxu0 %v379
        %665 = vmatpush.msra.mxu0 %v378
        %666 = vmatpush.msra.mxu0 %v377
        %667 = vmatpush.msra.mxu0 %v376
        %668 = vmatpush.msra.mxu0 %v375
        %669 = vmatpush.msra.mxu0 %v374
        %670 = vmatpush.msra.mxu0 %v373
        %671 = vmatpush.msra.mxu0 %v372
        %672 = vmatpush.msra.mxu0 %v371
        %673 = vmatpush.msra.mxu0 %v370
        %674 = vmatpush.msra.mxu0 %v369
        %675 = vmatpush.msra.mxu0 %v368
        %676 = vmatpush.msra.mxu0 %v367
        %677 = vmatpush.msra.mxu0 %v366
        %678 = vmatmul.f32.gmra.mxu0 %v215
        %v679 = vpop.f32.mrf.mxu0
        %v680 = vadd.f32 %v660, %v679
        %681 = vdwg.mxu0
        %682 = vmatpush.msra.mxu0 %v397
        %683 = vmatpush.msra.mxu0 %v396
        %684 = vmatpush.msra.mxu0 %v395
        %685 = vmatpush.msra.mxu0 %v394
        %686 = vmatpush.msra.mxu0 %v393
        %687 = vmatpush.msra.mxu0 %v392
        %688 = vmatpush.msra.mxu0 %v391
        %689 = vmatpush.msra.mxu0 %v390
        %690 = vmatpush.msra.mxu0 %v389
        %691 = vmatpush.msra.mxu0 %v388
        %692 = vmatpush.msra.mxu0 %v387
        %693 = vmatpush.msra.mxu0 %v386
        %694 = vmatpush.msra.mxu0 %v385
        %695 = vmatpush.msra.mxu0 %v384
        %696 = vmatpush.msra.mxu0 %v383
        %697 = vmatpush.msra.mxu0 %v382
        %698 = vmatmul.f32.gmra.mxu0 %v216
        %v699 = vpop.f32.mrf.mxu0
        %v700 = vadd.f32 %v680, %v699
        %701 = vdwg.mxu0
        %702 = vmatpush.msra.mxu0 %v413
        %703 = vmatpush.msra.mxu0 %v412
        %704 = vmatpush.msra.mxu0 %v411
        %705 = vmatpush.msra.mxu0 %v410
        %706 = vmatpush.msra.mxu0 %v409
        %707 = vmatpush.msra.mxu0 %v408
        %708 = vmatpush.msra.mxu0 %v407
        %709 = vmatpush.msra.mxu0 %v406
        %710 = vmatpush.msra.mxu0 %v405
        %711 = vmatpush.msra.mxu0 %v404
        %712 = vmatpush.msra.mxu0 %v403
        %713 = vmatpush.msra.mxu0 %v402
        %714 = vmatpush.msra.mxu0 %v401
        %715 = vmatpush.msra.mxu0 %v400
        %716 = vmatpush.msra.mxu0 %v399
        %717 = vmatpush.msra.mxu0 %v398
        %718 = vmatmul.f32.gmra.mxu0 %v217
        %v719 = vpop.f32.mrf.mxu0
        %v720 = vadd.f32 %v700, %v719
        %721 = vdwg.mxu0
        %722 = vmatpush.msra.mxu0 %v429
        %723 = vmatpush.msra.mxu0 %v428
        %724 = vmatpush.msra.mxu0 %v427
        %725 = vmatpush.msra.mxu0 %v426
        %726 = vmatpush.msra.mxu0 %v425
        %727 = vmatpush.msra.mxu0 %v424
        %728 = vmatpush.msra.mxu0 %v423
        %729 = vmatpush.msra.mxu0 %v422
        %730 = vmatpush.msra.mxu0 %v421
        %731 = vmatpush.msra.mxu0 %v420
        %732 = vmatpush.msra.mxu0 %v419
        %733 = vmatpush.msra.mxu0 %v418
        %734 = vmatpush.msra.mxu0 %v417
        %735 = vmatpush.msra.mxu0 %v416
        %736 = vmatpush.msra.mxu0 %v415
        %737 = vmatpush.msra.mxu0 %v414
        %738 = vmatmul.f32.gmra.mxu0 %v218
        %v739 = vpop.f32.mrf.mxu0
        %v740 = vadd.f32 %v720, %v739
        %741 = vdwg.mxu0
        %742 = vmatpush.msra.mxu0 %v445
        %743 = vmatpush.msra.mxu0 %v444
        %744 = vmatpush.msra.mxu0 %v443
        %745 = vmatpush.msra.mxu0 %v442
        %746 = vmatpush.msra.mxu0 %v441
        %747 = vmatpush.msra.mxu0 %v440
        %748 = vmatpush.msra.mxu0 %v439
        %749 = vmatpush.msra.mxu0 %v438
        %750 = vmatpush.msra.mxu0 %v437
        %751 = vmatpush.msra.mxu0 %v436
        %752 = vmatpush.msra.mxu0 %v435
        %753 = vmatpush.msra.mxu0 %v434
        %754 = vmatpush.msra.mxu0 %v433
        %755 = vmatpush.msra.mxu0 %v432
        %756 = vmatpush.msra.mxu0 %v431
        %757 = vmatpush.msra.mxu0 %v430
        %758 = vmatmul.f32.gmra.mxu0 %v219
        %v759 = vpop.f32.mrf.mxu0
        %v760 = vadd.f32 %v740, %v759
        %761 = vdwg.mxu0
        %762 = vmatpush.msra.mxu0 %v461
        %763 = vmatpush.msra.mxu0 %v460
        %764 = vmatpush.msra.mxu0 %v459
        %765 = vmatpush.msra.mxu0 %v458
        %766 = vmatpush.msra.mxu0 %v457
        %767 = vmatpush.msra.mxu0 %v456
        %768 = vmatpush.msra.mxu0 %v455
        %769 = vmatpush.msra.mxu0 %v454
        %770 = vmatpush.msra.mxu0 %v453
        %771 = vmatpush.msra.mxu0 %v452
        %772 = vmatpush.msra.mxu0 %v451
        %773 = vmatpush.msra.mxu0 %v450
        %774 = vmatpush.msra.mxu0 %v449
        %775 = vmatpush.msra.mxu0 %v448
        %776 = vmatpush.msra.mxu0 %v447
        %777 = vmatpush.msra.mxu0 %v446
        %778 = vmatmul.f32.gmra.mxu0 %v220
        %v779 = vpop.f32.mrf.mxu0
        %v780 = vadd.f32 %v760, %v779
        %781 = vdwg.mxu0
        %782 = vmatpush.msra.mxu0 %v477
        %783 = vmatpush.msra.mxu0 %v476
        %784 = vmatpush.msra.mxu0 %v475
        %785 = vmatpush.msra.mxu0 %v474
        %786 = vmatpush.msra.mxu0 %v473
        %787 = vmatpush.msra.mxu0 %v472
        %788 = vmatpush.msra.mxu0 %v471
        %789 = vmatpush.msra.mxu0 %v470
        %790 = vmatpush.msra.mxu0 %v469
        %791 = vmatpush.msra.mxu0 %v468
        %792 = vmatpush.msra.mxu0 %v467
        %793 = vmatpush.msra.mxu0 %v466
        %794 = vmatpush.msra.mxu0 %v465
        %795 = vmatpush.msra.mxu0 %v464
        %796 = vmatpush.msra.mxu0 %v463
        %797 = vmatpush.msra.mxu0 %v462
        %798 = vmatmul.f32.gmra.mxu0 %v221
        %v799 = vpop.f32.mrf.mxu0
        %v800 = vadd.f32 %v780, %v799
        %801 = vdwg.mxu0
        %802 = vst [vmem:[%s205] sm:$0xff] %v800
        %s803 = sand.u32 %s97, 1
        %s804 = scalar_lea.sflag [#allocation4], %s803
        %s805 = sand.u32 %s97, 1
        %s806 = smul.addr %s805, 8
        %s807 = scalar_lea.vmem [#allocation7], %s806
        // Predicated region
        $region41: #{tpu_custom_call.1} parent=31 // pred_check
          %p808 = pneg %p107
        $region42: #{tpu_custom_call.1} parent=31 // pred_check_branch
          %810 = sbr.rel (%p808) target = $region44
        $region43: #{tpu_custom_call.1} parent=31 // pred_region
          %812 = vsyncadd %s804, 0
          %s813 = smul.addr %s21, 8
          %s814 = scalar_lea.hbm %s3, %s813
          %s816 = sshll.u32 %s807, 4
          %s817 = int_to_ptr.vmem [resolvable:$true] %s816
          %s818 = sshll.u32 %s814, 4
          %s819 = int_to_ptr.hbm [resolvable:$true] %s818
          %821 = dma.vmem_to_hbm [thread:$0]  %s817, 128, %s819, %s804
        $region44: #{tpu_custom_call.1} parent=31 // pred_fallthru
          _
      $region32: #{tpu_custom_call.1} parent=5 // pred_fallthru
        _
      %p822 = scmp.le.s32.totalorder 2, %s16
      // Predicated region
      $region45: #{tpu_custom_call.1} parent=5 // pred_check
        %p823 = pneg %p822
      $region46: #{tpu_custom_call.1} parent=5 // pred_check_branch
        %825 = sbr.rel (%p823) target = $region48
      $region47: #{tpu_custom_call.1} parent=5 // pred_region
        %s826 = ssub.s32 %s16, 2
        // Predicated region
        $region49: #{tpu_custom_call.1} parent=47 // pred_check
          %p827 = pneg %p113
        $region50: #{tpu_custom_call.1} parent=47 // pred_check_branch
          %829 = sbr.rel (%p827) target = $region52
        $region51: #{tpu_custom_call.1} parent=47 // pred_region
          %s830 = sand.u32 %s98, 1
          %s831 = scalar_lea.sflag [#allocation4], %s830
          %s832 = sand.u32 %s98, 1
          %s833 = smul.addr %s832, 8
          %s834 = scalar_lea.vmem [#allocation7], %s833
          %836 = dma.done %s831, 128
        $region52: #{tpu_custom_call.1} parent=47 // pred_fallthru
          _
      $region48: #{tpu_custom_call.1} parent=5 // pred_fallthru
        _
    $region6: #{tpu_custom_call.1} parent=1 // loop_footer
      %s20 = sadd.s32 1, %s16
    $region7: #{tpu_custom_call.1} parent=1 // loop_footer_branch
      %15 = sbr.rel target = $region3
    $region8: #{tpu_custom_call.1} parent=1 // loop_exit
      _
    %837 = vsyncpa [#allocation3], 1
    %s838 = scalar_lea.sflag [#allocation3], 1
    %839 = vsyncpa %s838, 1
    %840 = vsyncpa [#allocation6], 1
    %841 = vsyncpa [#allocation4], 1
    %s842 = scalar_lea.sflag [#allocation4], 1
    %843 = vsyncpa %s842, 1

</llo_original>
